<compile_context>
chip_gen: v6e
topology: v6e:2x2x1
jax: 0.10.0
libtpu: 0.0.40
codegen_flags: <defaults>
</compile_context>

<pallas_src>
import functools
import math

import jax
import jax.numpy as jnp
from jax.experimental import pallas as pl
from jax.experimental.pallas import tpu as pltpu


def gating_kernel(scale_ref, x_ref,
                  w0_ref, b0_ref, w1_ref, b1_ref,
                  w2_ref, b2_ref, w3_ref, b3_ref,
                  o_ref, *, temperature):
    # Hidden MLP stack (3 hidden layers + ReLU).  Matmul operands are bf16,
    # accumulation is f32; bias add / ReLU run in f32, then cast back to bf16
    # to feed the next MXU matmul.
    h = x_ref[...]  # bf16
    h = jnp.maximum(
        jnp.dot(h, w0_ref[...], preferred_element_type=jnp.float32) + b0_ref[...],
        0.0).astype(jnp.bfloat16)
    h = jnp.maximum(
        jnp.dot(h, w1_ref[...], preferred_element_type=jnp.float32) + b1_ref[...],
        0.0).astype(jnp.bfloat16)
    h = jnp.maximum(
        jnp.dot(h, w2_ref[...], preferred_element_type=jnp.float32) + b2_ref[...],
        0.0).astype(jnp.bfloat16)
    logits = jnp.dot(h, w3_ref[...], preferred_element_type=jnp.float32) + b3_ref[...]

    # Temperature-scaled softmax over features (dim=1), numerically stable,
    # all in f32.  The 1/sum goes to the EUP (approx reciprocal); the
    # logit_scale is folded into the same per-row factor so only a single
    # full-tile multiply hits the output tile.
    z = logits * (1.0 / temperature)
    z = z - jnp.max(z, axis=1, keepdims=True)
    e = jnp.exp(z)
    inv = pl.reciprocal(jnp.sum(e, axis=1, keepdims=True), approx=True)
    o_ref[...] = (e * (inv * scale_ref[...])).astype(o_ref.dtype)
    # TODO(synk): dropout is skipped — module default dropout=0.0 and eval-mode
    # dropout is identity, so this matches the reference forward exactly.


def gating_forward(x, params, *, temperature, block_batch=None):
    (w0, b0, w1, b1, w2, b2, w3, b3, logit_scale) = params
    B, f_in = x.shape
    hid = w0.shape[1]
    f_out = w3.shape[1]
    out_dtype = x.dtype
    out_bytes = jnp.dtype(out_dtype).itemsize

    # bf16 MXU operands (f32 accumulate in-kernel); biases / scale stay f32.
    xb = x.astype(jnp.bfloat16)
    w0b, w1b, w2b, w3b = (w.astype(jnp.bfloat16) for w in (w0, w1, w2, w3))
    scale2d = logit_scale.reshape(1, 1).astype(jnp.float32)

    # Batch tile: big enough to fill the MXU M-dim and amortize grid overhead.
    if block_batch is None:
        block_batch = min(B, 512)
    block_batch = max(8, block_batch)
    block_batch = ((block_batch + 7) // 8) * 8  # multiple of 8 sublanes

    # VMEM budget check (v7x scoped default ~32 MiB of 64 MiB physical):
    # double-buffered x/out tiles + resident weights/biases (counted 2x to be
    # conservative).
    def vmem_estimate(bb):
        act = 2 * bb * (f_in * 2 + f_out * out_bytes)
        wts = 2 * ((f_in * hid + 2 * hid * hid + hid * f_out) * 2
                   + (3 * hid + f_out) * 4)
        return act + wts
    while block_batch > 8 and vmem_estimate(block_batch) > 30 * 1024 * 1024:
        block_batch //= 2
        block_batch = ((block_batch + 7) // 8) * 8

    # Pad batch to a multiple of the tile (padded rows are discarded below).
    B_pad = pl.cdiv(B, block_batch) * block_batch
    if B_pad != B:
        xb = jnp.pad(xb, ((0, B_pad - B), (0, 0)))

    grid = (B_pad // block_batch,)

    def fixed(shape):
        # Whole-array block, constant index across the batch grid axis
        # (weights stay resident in VMEM; Pallas does not re-DMA them).
        return pl.BlockSpec(shape, lambda i, _shape=shape: tuple(0 for _ in _shape))

    kernel = functools.partial(gating_kernel, temperature=float(temperature))

    # TODO(synk): for production batch sizes, present the output lane-dense
    # (reshape (B, f_out) -> (B//G, G*f_out) with G*f_out % 128 == 0) to turn
    # masked vst into full-width stores; irrelevant at demo sizes.
    out = pl.pallas_call(
        kernel,
        out_shape=jax.ShapeDtypeStruct((B_pad, f_out), out_dtype),
        grid_spec=pltpu.PrefetchScalarGridSpec(
            num_scalar_prefetch=0,
            grid=grid,
            in_specs=[
                fixed((1, 1)),                                        # logit_scale
                pl.BlockSpec((block_batch, f_in), lambda i: (i, 0)),  # x tile (bf16)
                fixed((f_in, hid)), fixed((1, hid)),                  # layer 0
                fixed((hid, hid)), fixed((1, hid)),                   # layer 1
                fixed((hid, hid)), fixed((1, hid)),                   # layer 2
                fixed((hid, f_out)), fixed((1, f_out)),               # output layer
            ],
            out_specs=pl.BlockSpec((block_batch, f_out), lambda i: (i, 0)),
        ),
        compiler_params=pltpu.CompilerParams(
            dimension_semantics=("parallel",)),
    )(scale2d, xb, w0b, b0, w1b, b1, w2b, b2, w3b, b3)

    return out[:B] if B_pad != B else out


def init_params(key, in_features, hidden_dim, out_features, logit_scale_init=1.0):
    dims = [(in_features, hidden_dim), (hidden_dim, hidden_dim),
            (hidden_dim, hidden_dim), (hidden_dim, out_features)]
    params = []
    for (fi, fo) in dims:
        key, kw, kb = jax.random.split(key, 3)
        bound = 1.0 / math.sqrt(fi)
        w = jax.random.uniform(kw, (fi, fo), jnp.float32, -bound, bound)
        b = jax.random.uniform(kb, (1, fo), jnp.float32, -bound, bound)
        params.extend([w, b])
    params.append(jnp.ones((1,), jnp.float32) * logit_scale_init)
    return tuple(params)


def reference_forward(x, params, temperature):
    # Pure-JAX reference with the same bf16 operand / f32 accumulate recipe
    # the kernel uses (so only the approx reciprocal differs).
    (w0, b0, w1, b1, w2, b2, w3, b3, logit_scale) = params

    def mm(a, w):
        return jnp.dot(a.astype(jnp.bfloat16), w.astype(jnp.bfloat16),
                       preferred_element_type=jnp.float32)

    h = jax.nn.relu(mm(x, w0) + b0)
    h = jax.nn.relu(mm(h, w1) + b1)
    h = jax.nn.relu(mm(h, w2) + b2)
    logits = mm(h, w3) + b3
    return jax.nn.softmax(logits / temperature, axis=1) * logit_scale[0]


if __name__ == "__main__":
    key = jax.random.PRNGKey(0)
    k_x, k_p = jax.random.split(key)

    batch = 16
    in_features = 64
    hidden_dim = 128
    out_features = 4
    temperature = 10.0

    x = jax.random.normal(k_x, (batch, in_features), jnp.float32)
    params = init_params(k_p, in_features, hidden_dim, out_features)

    out = gating_forward(x, params, temperature=temperature)
    out = jax.block_until_ready(out)

    ref = reference_forward(x, params, temperature)
    assert out.shape == (batch, out_features)
    # approx reciprocal (EUP) + bf16 matmul operands => slightly looser tol.
    assert jnp.allclose(out, ref, atol=2e-3, rtol=2e-3)

    print("KERNEL_OK")
</pallas_src>

<mosaic_0001>
module attributes {stable_mosaic.version = 11 : i64} {
  func.func @gating_kernel(%arg0: i32, %arg1: memref<1x1xf32, #tpu.memory_space<vmem>>, %arg2: memref<16x64xbf16, #tpu.memory_space<vmem>>, %arg3: memref<64x128xbf16, #tpu.memory_space<vmem>>, %arg4: memref<1x128xf32, #tpu.memory_space<vmem>>, %arg5: memref<128x128xbf16, #tpu.memory_space<vmem>>, %arg6: memref<1x128xf32, #tpu.memory_space<vmem>>, %arg7: memref<128x128xbf16, #tpu.memory_space<vmem>>, %arg8: memref<1x128xf32, #tpu.memory_space<vmem>>, %arg9: memref<128x4xbf16, #tpu.memory_space<vmem>>, %arg10: memref<1x4xf32, #tpu.memory_space<vmem>>, %arg11: memref<16x4xf32, #tpu.memory_space<vmem>>) attributes {dimension_semantics = [#tpu.dimension_semantics<parallel>], iteration_bounds = array<i64: 1>, scalar_prefetch = 0 : i64, scratch_operands = 0 : i64, tpu.core_type = #tpu.core_type<tc>, window_params = [{pipeline_mode = #tpu.pipeline_mode<synchronous>, transform_indices = @transform_0, window_bounds = array<i64: 1, 1>}, {transform_indices = @transform_1, window_bounds = array<i64: 16, 64>}, {pipeline_mode = #tpu.pipeline_mode<synchronous>, transform_indices = @transform_2, window_bounds = array<i64: 64, 128>}, {pipeline_mode = #tpu.pipeline_mode<synchronous>, transform_indices = @transform_3, window_bounds = array<i64: 1, 128>}, {pipeline_mode = #tpu.pipeline_mode<synchronous>, transform_indices = @transform_4, window_bounds = array<i64: 128, 128>}, {pipeline_mode = #tpu.pipeline_mode<synchronous>, transform_indices = @transform_5, window_bounds = array<i64: 1, 128>}, {pipeline_mode = #tpu.pipeline_mode<synchronous>, transform_indices = @transform_6, window_bounds = array<i64: 128, 128>}, {pipeline_mode = #tpu.pipeline_mode<synchronous>, transform_indices = @transform_7, window_bounds = array<i64: 1, 128>}, {pipeline_mode = #tpu.pipeline_mode<synchronous>, transform_indices = @transform_8, window_bounds = array<i64: 128, 4>}, {pipeline_mode = #tpu.pipeline_mode<synchronous>, transform_indices = @transform_9, window_bounds = array<i64: 1, 4>}, {transform_indices = @transform_10, window_bounds = array<i64: 16, 4>}]} {
    %c0 = arith.constant 0 : index
    %c0_0 = arith.constant 0 : index
    %0 = vector.load %arg2[%c0, %c0_0] : memref<16x64xbf16, #tpu.memory_space<vmem>>, vector<16x64xbf16>
    %c0_1 = arith.constant 0 : index
    %c0_2 = arith.constant 0 : index
    %1 = vector.load %arg3[%c0_1, %c0_2] : memref<64x128xbf16, #tpu.memory_space<vmem>>, vector<64x128xbf16>
    %cst = arith.constant dense<0.000000e+00> : vector<16x128xf32>
    %2 = tpu.matmul %0, %1, %cst {dimension_numbers = #tpu.dot_dimension_numbers<[1], [0], [0], [1], [0, 0, 1, 1], [], []>} : vector<16x64xbf16>, vector<64x128xbf16>, vector<16x128xf32> -> vector<16x128xf32>
    %c0_3 = arith.constant 0 : index
    %c0_4 = arith.constant 0 : index
    %3 = vector.load %arg4[%c0_3, %c0_4] : memref<1x128xf32, #tpu.memory_space<vmem>>, vector<1x128xf32>
    %4 = vector.broadcast %3 : vector<1x128xf32> to vector<16x128xf32>
    %5 = arith.addf %2, %4 : vector<16x128xf32>
    %cst_5 = arith.constant 0.000000e+00 : f32
    %6 = vector.broadcast %cst_5 : f32 to vector<16x128xf32>
    %7 = arith.maximumf %5, %6 : vector<16x128xf32>
    %8 = arith.truncf %7 : vector<16x128xf32> to vector<16x128xbf16>
    %c0_6 = arith.constant 0 : index
    %c0_7 = arith.constant 0 : index
    %9 = vector.load %arg5[%c0_6, %c0_7] : memref<128x128xbf16, #tpu.memory_space<vmem>>, vector<128x128xbf16>
    %cst_8 = arith.constant dense<0.000000e+00> : vector<16x128xf32>
    %10 = tpu.matmul %8, %9, %cst_8 {dimension_numbers = #tpu.dot_dimension_numbers<[1], [0], [0], [1], [0, 0, 1, 1], [], []>} : vector<16x128xbf16>, vector<128x128xbf16>, vector<16x128xf32> -> vector<16x128xf32>
    %c0_9 = arith.constant 0 : index
    %c0_10 = arith.constant 0 : index
    %11 = vector.load %arg6[%c0_9, %c0_10] : memref<1x128xf32, #tpu.memory_space<vmem>>, vector<1x128xf32>
    %12 = vector.broadcast %11 : vector<1x128xf32> to vector<16x128xf32>
    %13 = arith.addf %10, %12 : vector<16x128xf32>
    %cst_11 = arith.constant 0.000000e+00 : f32
    %14 = vector.broadcast %cst_11 : f32 to vector<16x128xf32>
    %15 = arith.maximumf %13, %14 : vector<16x128xf32>
    %16 = arith.truncf %15 : vector<16x128xf32> to vector<16x128xbf16>
    %c0_12 = arith.constant 0 : index
    %c0_13 = arith.constant 0 : index
    %17 = vector.load %arg7[%c0_12, %c0_13] : memref<128x128xbf16, #tpu.memory_space<vmem>>, vector<128x128xbf16>
    %cst_14 = arith.constant dense<0.000000e+00> : vector<16x128xf32>
    %18 = tpu.matmul %16, %17, %cst_14 {dimension_numbers = #tpu.dot_dimension_numbers<[1], [0], [0], [1], [0, 0, 1, 1], [], []>} : vector<16x128xbf16>, vector<128x128xbf16>, vector<16x128xf32> -> vector<16x128xf32>
    %c0_15 = arith.constant 0 : index
    %c0_16 = arith.constant 0 : index
    %19 = vector.load %arg8[%c0_15, %c0_16] : memref<1x128xf32, #tpu.memory_space<vmem>>, vector<1x128xf32>
    %20 = vector.broadcast %19 : vector<1x128xf32> to vector<16x128xf32>
    %21 = arith.addf %18, %20 : vector<16x128xf32>
    %cst_17 = arith.constant 0.000000e+00 : f32
    %22 = vector.broadcast %cst_17 : f32 to vector<16x128xf32>
    %23 = arith.maximumf %21, %22 : vector<16x128xf32>
    %24 = arith.truncf %23 : vector<16x128xf32> to vector<16x128xbf16>
    %c0_18 = arith.constant 0 : index
    %c0_19 = arith.constant 0 : index
    %25 = vector.load %arg9[%c0_18, %c0_19] : memref<128x4xbf16, #tpu.memory_space<vmem>>, vector<128x4xbf16>
    %cst_20 = arith.constant dense<0.000000e+00> : vector<16x4xf32>
    %26 = tpu.matmul %24, %25, %cst_20 {dimension_numbers = #tpu.dot_dimension_numbers<[1], [0], [0], [1], [0, 0, 1, 1], [], []>} : vector<16x128xbf16>, vector<128x4xbf16>, vector<16x4xf32> -> vector<16x4xf32>
    %c0_21 = arith.constant 0 : index
    %c0_22 = arith.constant 0 : index
    %27 = vector.load %arg10[%c0_21, %c0_22] : memref<1x4xf32, #tpu.memory_space<vmem>>, vector<1x4xf32>
    %28 = vector.broadcast %27 : vector<1x4xf32> to vector<16x4xf32>
    %29 = arith.addf %26, %28 : vector<16x4xf32>
    %cst_23 = arith.constant 1.000000e-01 : f32
    %30 = vector.broadcast %cst_23 : f32 to vector<16x4xf32>
    %31 = arith.mulf %29, %30 : vector<16x4xf32>
    %cst_24 = arith.constant dense<0xFF800000> : vector<16xf32>
    %32 = vector.multi_reduction <maximumf>, %31, %cst_24 [1] : vector<16x4xf32> to vector<16xf32>
    %33 = vector.shape_cast %32 : vector<16xf32> to vector<16x1xf32>
    %34 = vector.broadcast %33 : vector<16x1xf32> to vector<16x4xf32>
    %35 = arith.subf %31, %34 : vector<16x4xf32>
    %36 = math.exp %35 : vector<16x4xf32>
    %cst_25 = arith.constant dense<0.000000e+00> : vector<16xf32>
    %37 = vector.multi_reduction <add>, %36, %cst_25 [1] : vector<16x4xf32> to vector<16xf32>
    %38 = vector.shape_cast %37 : vector<16xf32> to vector<16x1xf32>
    %39 = tpu.reciprocal %38 {approx = true} : vector<16x1xf32> -> vector<16x1xf32>
    %c0_26 = arith.constant 0 : index
    %c0_27 = arith.constant 0 : index
    %40 = vector.load %arg1[%c0_26, %c0_27] : memref<1x1xf32, #tpu.memory_space<vmem>>, vector<1x1xf32>
    %41 = vector.broadcast %40 : vector<1x1xf32> to vector<16x1xf32>
    %42 = arith.mulf %39, %41 : vector<16x1xf32>
    %43 = vector.broadcast %42 : vector<16x1xf32> to vector<16x4xf32>
    %44 = arith.mulf %36, %43 : vector<16x4xf32>
    %c0_28 = arith.constant 0 : index
    %c0_29 = arith.constant 0 : index
    %45 = vector.load %arg11[%c0_28, %c0_29] : memref<16x4xf32, #tpu.memory_space<vmem>>, vector<16x4xf32>
    tpu.vector_store %arg11[%c0_28, %c0_29], %44 {strides = array<i32>} : memref<16x4xf32, #tpu.memory_space<vmem>>, vector<16x4xf32>,
    return
  }
  func.func @transform_0(%arg0: i32) -> (i32, i32) {
    %c0_i32 = arith.constant 0 : i32
    %c0_i32_0 = arith.constant 0 : i32
    %c0_i32_1 = arith.constant 0 : i32
    return %c0_i32, %c0_i32_0 : i32, i32
  }
  func.func @transform_1(%arg0: i32) -> (i32, i32) {
    %c0_i32 = arith.constant 0 : i32
    %c0_i32_0 = arith.constant 0 : i32
    return %arg0, %c0_i32 : i32, i32
  }
  func.func @transform_2(%arg0: i32) -> (i32, i32) {
    %c0_i32 = arith.constant 0 : i32
    %c0_i32_0 = arith.constant 0 : i32
    %c0_i32_1 = arith.constant 0 : i32
    return %c0_i32, %c0_i32_0 : i32, i32
  }
  func.func @transform_3(%arg0: i32) -> (i32, i32) {
    %c0_i32 = arith.constant 0 : i32
    %c0_i32_0 = arith.constant 0 : i32
    %c0_i32_1 = arith.constant 0 : i32
    return %c0_i32, %c0_i32_0 : i32, i32
  }
  func.func @transform_4(%arg0: i32) -> (i32, i32) {
    %c0_i32 = arith.constant 0 : i32
    %c0_i32_0 = arith.constant 0 : i32
    %c0_i32_1 = arith.constant 0 : i32
    return %c0_i32, %c0_i32_0 : i32, i32
  }
  func.func @transform_5(%arg0: i32) -> (i32, i32) {
    %c0_i32 = arith.constant 0 : i32
    %c0_i32_0 = arith.constant 0 : i32
    %c0_i32_1 = arith.constant 0 : i32
    return %c0_i32, %c0_i32_0 : i32, i32
  }
  func.func @transform_6(%arg0: i32) -> (i32, i32) {
    %c0_i32 = arith.constant 0 : i32
    %c0_i32_0 = arith.constant 0 : i32
    %c0_i32_1 = arith.constant 0 : i32
    return %c0_i32, %c0_i32_0 : i32, i32
  }
  func.func @transform_7(%arg0: i32) -> (i32, i32) {
    %c0_i32 = arith.constant 0 : i32
    %c0_i32_0 = arith.constant 0 : i32
    %c0_i32_1 = arith.constant 0 : i32
    return %c0_i32, %c0_i32_0 : i32, i32
  }
  func.func @transform_8(%arg0: i32) -> (i32, i32) {
    %c0_i32 = arith.constant 0 : i32
    %c0_i32_0 = arith.constant 0 : i32
    %c0_i32_1 = arith.constant 0 : i32
    return %c0_i32, %c0_i32_0 : i32, i32
  }
  func.func @transform_9(%arg0: i32) -> (i32, i32) {
    %c0_i32 = arith.constant 0 : i32
    %c0_i32_0 = arith.constant 0 : i32
    %c0_i32_1 = arith.constant 0 : i32
    return %c0_i32, %c0_i32_0 : i32, i32
  }
  func.func @transform_10(%arg0: i32) -> (i32, i32) {
    %c0_i32 = arith.constant 0 : i32
    %c0_i32_0 = arith.constant 0 : i32
    return %arg0, %c0_i32 : i32, i32
  }
}

</mosaic_0001>

<llo_original>
// kernel: tpu_custom_call.1
$region0: #{tpu_custom_call.1}
  #allocation0 [shape = 'u32[]', space=smem, size = 0x4, offset = 0x4, fixed_abs, tag = 'smem constant byte address 0x4 - core index']
  #allocation1 [shape = 'u32[144,128]{1,0:T(1,128)}', space=vmem, size = 0x12000, scoped, tag = 'internal scratch']
  #allocation2 [shape = 'f32[1,1]{1,0:T(1,128)S(1)}', space=vmem, size = 0x200, scoped, tag = 'scoped memory for tpu_custom_call.1']
  %s0 = inlined_call_operand.<no memory space> [shape: f32[1,1], index: 0, kind: input, shape index: {}]
  %s1 = inlined_call_operand.vmem [shape: bf16[16,64], index: 1, kind: input, shape index: {}]
  %s2 = inlined_call_operand.hbm [shape: bf16[64,128], index: 2, kind: input, shape index: {}]
  %s3 = inlined_call_operand.vmem [shape: f32[1,128], index: 3, kind: input, shape index: {}]
  %s4 = inlined_call_operand.vmem [shape: bf16[128,128], index: 4, kind: input, shape index: {}]
  %s5 = inlined_call_operand.hbm [shape: f32[1,128], index: 5, kind: input, shape index: {}]
  %s6 = inlined_call_operand.hbm [shape: bf16[128,128], index: 6, kind: input, shape index: {}]
  %s7 = inlined_call_operand.vmem [shape: f32[1,128], index: 7, kind: input, shape index: {}]
  %s8 = inlined_call_operand.vmem [shape: bf16[128,4], index: 8, kind: input, shape index: {}]
  %s9 = inlined_call_operand.vmem [shape: f32[1,4], index: 9, kind: input, shape index: {}]
  %s10 = inlined_call_operand.vmem [shape: f32[16,4], index: 10, kind: output, shape index: {}]
  %s11 = sld [smem:[#allocation0]]
  $region62: #{tpu_custom_call.1} parent=0
    _
  %s13 = ssub.s32 1, %s11
  %s14 = scalar_select 0, %s13, %s11
  %v15 = vstv %s0
  %16 = vst [vmem:[#allocation2] sm:$0x1] %v15
  $region1: #{tpu_custom_call.1} parent=0
    #allocation3 [shape = 'u8[16384]{0}', space=vmem, size = 0x4000, scoped, tag = 'input window, operand 2, single buffered']
    #allocation4 [shape = 's32[1]{0}', space=sflag, size = 0x4, scoped, tag = 'scoped memory for tpu_custom_call.1']
    #allocation5 [shape = 'u8[512]{0}', space=vmem, size = 0x400, scoped, tag = 'input window, operand 5, single buffered']
    #allocation6 [shape = 's32[1]{0}', space=sflag, size = 0x4, scoped, tag = 'scoped memory for tpu_custom_call.1']
    #allocation7 [shape = 'u8[32768]{0}', space=vmem, size = 0x8000, scoped, tag = 'input window, operand 6, single buffered']
    %17 = vsyncpa [#allocation4], 0
    %18 = vsyncpa [#allocation6], 0
    // Predicated region
    $region2: #{tpu_custom_call.1} parent=1 // pred_check
      _
    $region3: #{tpu_custom_call.1} parent=1 // pred_check_branch
      %20 = sbr.rel (0) target = $region5
    $region4: #{tpu_custom_call.1} parent=1 // pred_region
      _
    $region5: #{tpu_custom_call.1} parent=1 // pred_fallthru
      _
    // Predicated region
    $region6: #{tpu_custom_call.1} parent=1 // pred_check
      _
    $region7: #{tpu_custom_call.1} parent=1 // pred_check_branch
      %22 = sbr.rel (0) target = $region9
    $region8: #{tpu_custom_call.1} parent=1 // pred_region
      _
    $region9: #{tpu_custom_call.1} parent=1 // pred_fallthru
      _
    // Predicated region
    $region10: #{tpu_custom_call.1} parent=1 // pred_check
      _
    $region11: #{tpu_custom_call.1} parent=1 // pred_check_branch
      %24 = sbr.rel (0) target = $region13
    $region12: #{tpu_custom_call.1} parent=1 // pred_region
      %s26 = ssub.s32 512, 512
      %27 = vsyncadd [#allocation4], %s26
      %s28 = sshll.u32 [#allocation3], 4
      %s29 = int_to_ptr.vmem [resolvable:$true] %s28
      %34 = dma.hbm_to_vmem [thread:$0]  %s2, 512, %s29, [#allocation4], 64, 64, 4
    $region13: #{tpu_custom_call.1} parent=1 // pred_fallthru
      _
    // Predicated region
    $region14: #{tpu_custom_call.1} parent=1 // pred_check
      _
    $region15: #{tpu_custom_call.1} parent=1 // pred_check_branch
      %36 = sbr.rel (0) target = $region17
    $region16: #{tpu_custom_call.1} parent=1 // pred_region
      _
    $region17: #{tpu_custom_call.1} parent=1 // pred_fallthru
      _
    // Predicated region
    $region18: #{tpu_custom_call.1} parent=1 // pred_check
      _
    $region19: #{tpu_custom_call.1} parent=1 // pred_check_branch
      %38 = sbr.rel (0) target = $region21
    $region20: #{tpu_custom_call.1} parent=1 // pred_region
      _
    $region21: #{tpu_custom_call.1} parent=1 // pred_fallthru
      _
    // Predicated region
    $region22: #{tpu_custom_call.1} parent=1 // pred_check
      _
    $region23: #{tpu_custom_call.1} parent=1 // pred_check_branch
      %40 = sbr.rel (0) target = $region25
    $region24: #{tpu_custom_call.1} parent=1 // pred_region
      %s42 = ssub.s32 16, 16
      %43 = vsyncadd [#allocation6], %s42
      %s45 = sshll.u32 [#allocation5], 4
      %s46 = int_to_ptr.vmem [resolvable:$true] %s45
      %48 = dma.hbm_to_vmem [thread:$0]  %s5, 16, %s46, [#allocation6]
    $region25: #{tpu_custom_call.1} parent=1 // pred_fallthru
      _
    // Predicated region
    $region26: #{tpu_custom_call.1} parent=1 // pred_check
      _
    $region27: #{tpu_custom_call.1} parent=1 // pred_check_branch
      %50 = sbr.rel (0) target = $region29
    $region28: #{tpu_custom_call.1} parent=1 // pred_region
      %s52 = ssub.s32 1024, 1024
      %53 = vsyncadd [#allocation6], %s52
      %s54 = sshll.u32 [#allocation7], 4
      %s55 = int_to_ptr.vmem [resolvable:$true] %s54
      %60 = dma.hbm_to_vmem [thread:$0]  %s6, 1024, %s55, [#allocation6], 64, 64, 4
    $region29: #{tpu_custom_call.1} parent=1 // pred_fallthru
      _
    // Predicated region
    $region30: #{tpu_custom_call.1} parent=1 // pred_check
      _
    $region31: #{tpu_custom_call.1} parent=1 // pred_check_branch
      %62 = sbr.rel (0) target = $region33
    $region32: #{tpu_custom_call.1} parent=1 // pred_region
      _
    $region33: #{tpu_custom_call.1} parent=1 // pred_fallthru
      _
    // Predicated region
    $region34: #{tpu_custom_call.1} parent=1 // pred_check
      _
    $region35: #{tpu_custom_call.1} parent=1 // pred_check_branch
      %64 = sbr.rel (0) target = $region37
    $region36: #{tpu_custom_call.1} parent=1 // pred_region
      _
    $region37: #{tpu_custom_call.1} parent=1 // pred_fallthru
      _
    // Predicated region
    $region38: #{tpu_custom_call.1} parent=1 // pred_check
      _
    $region39: #{tpu_custom_call.1} parent=1 // pred_check_branch
      %66 = sbr.rel (0) target = $region41
    $region40: #{tpu_custom_call.1} parent=1 // pred_region
      _
    $region41: #{tpu_custom_call.1} parent=1 // pred_fallthru
      _
    // Predicated region
    $region42: #{tpu_custom_call.1} parent=1 // pred_check
      _
    $region43: #{tpu_custom_call.1} parent=1 // pred_check_branch
      %68 = sbr.rel (0) target = $region45
    $region44: #{tpu_custom_call.1} parent=1 // pred_region
      %69 = dma.done [#allocation4], 512
    $region45: #{tpu_custom_call.1} parent=1 // pred_fallthru
      _
    // Predicated region
    $region46: #{tpu_custom_call.1} parent=1 // pred_check
      _
    $region47: #{tpu_custom_call.1} parent=1 // pred_check_branch
      %71 = sbr.rel (0) target = $region49
    $region48: #{tpu_custom_call.1} parent=1 // pred_region
      %72 = dma.done [#allocation6], 16
    $region49: #{tpu_custom_call.1} parent=1 // pred_fallthru
      _
    // Predicated region
    $region50: #{tpu_custom_call.1} parent=1 // pred_check
      _
    $region51: #{tpu_custom_call.1} parent=1 // pred_check_branch
      %74 = sbr.rel (0) target = $region53
    $region52: #{tpu_custom_call.1} parent=1 // pred_region
      %75 = dma.done [#allocation6], 1024
    $region53: #{tpu_custom_call.1} parent=1 // pred_fallthru
      _
    %v77 = vld [vmem:[%s1] sm:$0xf]
    %v78 = vld [vmem:[%s1 + $0x4] sm:$0xf]
    %v79 = vld [vmem:[#allocation3] sm:$0xf]
    %v80 = vld [vmem:[#allocation3 + $0x4] sm:$0xf]
    %v81 = vld [vmem:[#allocation3 + $0x8] sm:$0xf]
    %v82 = vld [vmem:[#allocation3 + $0xc] sm:$0xf]
    %v83 = vld [vmem:[#allocation3 + $0x10] sm:$0xf]
    %v84 = vld [vmem:[#allocation3 + $0x14] sm:$0xf]
    %v85 = vld [vmem:[#allocation3 + $0x18] sm:$0xf]
    %v86 = vld [vmem:[#allocation3 + $0x1c] sm:$0xf]
    %v87 = vld [vmem:[%s3] sm:$0x1]
    %v89 = vlaneseq
    %v90 = vshrl.u32 %v89, 7
    %v91 = vsub.s32 0, %v90
    %v92 = vrot.slane %v87, %v91
    %v96 = vunpack.c.l.b16 %v77
    %v97 = vunpack.c.l.b16 %v78
    %v98 = vpack.c.b16 %v97, %v96
    %v107 = vunpack.c.l.b16 %v79
    %v108 = vunpack.c.l.b16 %v80
    %v109 = vunpack.c.l.b16 %v81
    %v110 = vunpack.c.l.b16 %v82
    %v111 = vunpack.c.l.b16 %v83
    %v112 = vunpack.c.l.b16 %v84
    %v113 = vunpack.c.l.b16 %v85
    %v114 = vunpack.c.l.b16 %v86
    %v115 = vpack.c.b16 %v108, %v107
    %v116 = vpack.c.b16 %v110, %v109
    %v117 = vpack.c.b16 %v112, %v111
    %v118 = vpack.c.b16 %v114, %v113
    %vm123 = vcmask 523264
    %v125 = vsel %vm123, %v98, 0
    %127 = vmatprep.subr.bf16.mxu0 0
    %128 = vmatpush1.bf16.msra.mxu0 0
    %129 = vmatprep.subr.bf16.mxu0 0
    %130 = vmatpush1.bf16.msra.mxu0 0
    %131 = vmatprep.subr.bf16.mxu0 0
    %132 = vmatpush1.bf16.msra.mxu0 0
    %133 = vmatprep.subr.bf16.mxu0 0
    %134 = vmatpush1.bf16.msra.mxu0 0
    %135 = vmatprep.subr.bf16.mxu0 0
    %136 = vmatpush1.bf16.msra.mxu0 %v118
    %137 = vmatprep.subr.bf16.mxu0 0
    %138 = vmatpush1.bf16.msra.mxu0 %v117
    %139 = vmatprep.subr.bf16.mxu0 0
    %140 = vmatpush1.bf16.msra.mxu0 %v116
    %141 = vmatprep.subr.bf16.mxu0 0
    %142 = vmatpush1.bf16.msra.mxu0 %v115
    %143 = vmatprep.subr.bf16.mxu0 0
    %144 = vmatpush2.bf16.msra.mxu0 0
    %145 = vmatprep.subr.bf16.mxu0 0
    %146 = vmatpush2.bf16.msra.mxu0 0
    %147 = vmatprep.subr.bf16.mxu0 0
    %148 = vmatpush2.bf16.msra.mxu0 0
    %149 = vmatprep.subr.bf16.mxu0 0
    %150 = vmatpush2.bf16.msra.mxu0 0
    %151 = vmatprep.subr.bf16.mxu0 0
    %152 = vmatpush2.bf16.msra.mxu0 0
    %153 = vmatprep.subr.bf16.mxu0 0
    %154 = vmatpush2.bf16.msra.mxu0 0
    %155 = vmatprep.subr.bf16.mxu0 0
    %156 = vmatpush2.bf16.msra.mxu0 0
    %157 = vmatprep.subr.bf16.mxu0 0
    %158 = vmatpush2.bf16.msra.mxu0 0
    %159 = vmatprep.mubr.bf16.mxu0 0
    %160 = vmatmul.mubr.bf16.gmra.mxu0 %v125
    %v161 = vpop.f32.mrf.mxu0
    %v162 = vadd.f32 %v92, %v161
    %v163 = vpop.f32.mrf.mxu0
    %v164 = vpop.f32.mrf.mxu0
    %v165 = vadd.f32 %v92, %v164
    %v166 = vpop.f32.mrf.mxu0
    %167 = vdwg.mxu0
    %v168 = vmax.f32 %v162, 0.0
    %v169 = vmax.f32 %v165, 0.0
    %v170 = vpack.c.bf16 %v169, %v168
    %v171 = vld [vmem:[%s4] sm:$0xf]
    %v172 = vld [vmem:[%s4 + $0x4] sm:$0xf]
    %v173 = vld [vmem:[%s4 + $0x8] sm:$0xf]
    %v174 = vld [vmem:[%s4 + $0xc] sm:$0xf]
    %v175 = vld [vmem:[%s4 + $0x10] sm:$0xf]
    %v176 = vld [vmem:[%s4 + $0x14] sm:$0xf]
    %v177 = vld [vmem:[%s4 + $0x18] sm:$0xf]
    %v178 = vld [vmem:[%s4 + $0x1c] sm:$0xf]
    %v179 = vld [vmem:[%s4 + $0x20] sm:$0xf]
    %v180 = vld [vmem:[%s4 + $0x24] sm:$0xf]
    %v181 = vld [vmem:[%s4 + $0x28] sm:$0xf]
    %v182 = vld [vmem:[%s4 + $0x2c] sm:$0xf]
    %v183 = vld [vmem:[%s4 + $0x30] sm:$0xf]
    %v184 = vld [vmem:[%s4 + $0x34] sm:$0xf]
    %v185 = vld [vmem:[%s4 + $0x38] sm:$0xf]
    %v186 = vld [vmem:[%s4 + $0x3c] sm:$0xf]
    %v187 = vld [vmem:[#allocation5] sm:$0x1]
    %v189 = vlaneseq
    %v190 = vshrl.u32 %v189, 7
    %v191 = vsub.s32 0, %v190
    %v192 = vrot.slane %v187, %v191
    %v210 = vunpack.c.l.b16 %v171
    %v211 = vunpack.c.l.b16 %v172
    %v212 = vunpack.c.l.b16 %v173
    %v213 = vunpack.c.l.b16 %v174
    %v214 = vunpack.c.l.b16 %v175
    %v215 = vunpack.c.l.b16 %v176
    %v216 = vunpack.c.l.b16 %v177
    %v217 = vunpack.c.l.b16 %v178
    %v218 = vunpack.c.l.b16 %v179
    %v219 = vunpack.c.l.b16 %v180
    %v220 = vunpack.c.l.b16 %v181
    %v221 = vunpack.c.l.b16 %v182
    %v222 = vunpack.c.l.b16 %v183
    %v223 = vunpack.c.l.b16 %v184
    %v224 = vunpack.c.l.b16 %v185
    %v225 = vunpack.c.l.b16 %v186
    %v226 = vpack.c.b16 %v211, %v210
    %v227 = vpack.c.b16 %v213, %v212
    %v228 = vpack.c.b16 %v215, %v214
    %v229 = vpack.c.b16 %v217, %v216
    %v230 = vpack.c.b16 %v219, %v218
    %v231 = vpack.c.b16 %v221, %v220
    %v232 = vpack.c.b16 %v223, %v222
    %v233 = vpack.c.b16 %v225, %v224
    %242 = vmatprep.subr.bf16.mxu0 0
    %243 = vmatpush1.bf16.msra.mxu0 %v233
    %244 = vmatprep.subr.bf16.mxu0 0
    %245 = vmatpush1.bf16.msra.mxu0 %v232
    %246 = vmatprep.subr.bf16.mxu0 0
    %247 = vmatpush1.bf16.msra.mxu0 %v231
    %248 = vmatprep.subr.bf16.mxu0 0
    %249 = vmatpush1.bf16.msra.mxu0 %v230
    %250 = vmatprep.subr.bf16.mxu0 0
    %251 = vmatpush1.bf16.msra.mxu0 %v229
    %252 = vmatprep.subr.bf16.mxu0 0
    %253 = vmatpush1.bf16.msra.mxu0 %v228
    %254 = vmatprep.subr.bf16.mxu0 0
    %255 = vmatpush1.bf16.msra.mxu0 %v227
    %256 = vmatprep.subr.bf16.mxu0 0
    %257 = vmatpush1.bf16.msra.mxu0 %v226
    %258 = vmatprep.subr.bf16.mxu0 0
    %259 = vmatpush2.bf16.msra.mxu0 0
    %260 = vmatprep.subr.bf16.mxu0 0
    %261 = vmatpush2.bf16.msra.mxu0 0
    %262 = vmatprep.subr.bf16.mxu0 0
    %263 = vmatpush2.bf16.msra.mxu0 0
    %264 = vmatprep.subr.bf16.mxu0 0
    %265 = vmatpush2.bf16.msra.mxu0 0
    %266 = vmatprep.subr.bf16.mxu0 0
    %267 = vmatpush2.bf16.msra.mxu0 0
    %268 = vmatprep.subr.bf16.mxu0 0
    %269 = vmatpush2.bf16.msra.mxu0 0
    %270 = vmatprep.subr.bf16.mxu0 0
    %271 = vmatpush2.bf16.msra.mxu0 0
    %272 = vmatprep.subr.bf16.mxu0 0
    %273 = vmatpush2.bf16.msra.mxu0 0
    %274 = vmatprep.mubr.bf16.mxu0 0
    %275 = vmatmul.mubr.bf16.gmra.mxu0 %v170
    %v276 = vpop.f32.mrf.mxu0
    %v277 = vadd.f32 %v192, %v276
    %v278 = vpop.f32.mrf.mxu0
    %v279 = vpop.f32.mrf.mxu0
    %v280 = vadd.f32 %v192, %v279
    %v281 = vpop.f32.mrf.mxu0
    %282 = vdwg.mxu0
    %v283 = vmax.f32 %v277, 0.0
    %v284 = vmax.f32 %v280, 0.0
    %v285 = vpack.c.bf16 %v284, %v283
    %v286 = vld [vmem:[#allocation7] sm:$0xf]
    %v287 = vld [vmem:[#allocation7 + $0x4] sm:$0xf]
    %v288 = vld [vmem:[#allocation7 + $0x8] sm:$0xf]
    %v289 = vld [vmem:[#allocation7 + $0xc] sm:$0xf]
    %v290 = vld [vmem:[#allocation7 + $0x10] sm:$0xf]
    %v291 = vld [vmem:[#allocation7 + $0x14] sm:$0xf]
    %v292 = vld [vmem:[#allocation7 + $0x18] sm:$0xf]
    %v293 = vld [vmem:[#allocation7 + $0x1c] sm:$0xf]
    %v294 = vld [vmem:[#allocation7 + $0x20] sm:$0xf]
    %v295 = vld [vmem:[#allocation7 + $0x24] sm:$0xf]
    %v296 = vld [vmem:[#allocation7 + $0x28] sm:$0xf]
    %v297 = vld [vmem:[#allocation7 + $0x2c] sm:$0xf]
    %v298 = vld [vmem:[#allocation7 + $0x30] sm:$0xf]
    %v299 = vld [vmem:[#allocation7 + $0x34] sm:$0xf]
    %v300 = vld [vmem:[#allocation7 + $0x38] sm:$0xf]
    %v301 = vld [vmem:[#allocation7 + $0x3c] sm:$0xf]
    %v302 = vld [vmem:[%s7] sm:$0x1]
    %v304 = vlaneseq
    %v305 = vshrl.u32 %v304, 7
    %v306 = vsub.s32 0, %v305
    %v307 = vrot.slane %v302, %v306
    %v325 = vunpack.c.l.b16 %v286
    %v326 = vunpack.c.l.b16 %v287
    %v327 = vunpack.c.l.b16 %v288
    %v328 = vunpack.c.l.b16 %v289
    %v329 = vunpack.c.l.b16 %v290
    %v330 = vunpack.c.l.b16 %v291
    %v331 = vunpack.c.l.b16 %v292
    %v332 = vunpack.c.l.b16 %v293
    %v333 = vunpack.c.l.b16 %v294
    %v334 = vunpack.c.l.b16 %v295
    %v335 = vunpack.c.l.b16 %v296
    %v336 = vunpack.c.l.b16 %v297
    %v337 = vunpack.c.l.b16 %v298
    %v338 = vunpack.c.l.b16 %v299
    %v339 = vunpack.c.l.b16 %v300
    %v340 = vunpack.c.l.b16 %v301
    %v341 = vpack.c.b16 %v326, %v325
    %v342 = vpack.c.b16 %v328, %v327
    %v343 = vpack.c.b16 %v330, %v329
    %v344 = vpack.c.b16 %v332, %v331
    %v345 = vpack.c.b16 %v334, %v333
    %v346 = vpack.c.b16 %v336, %v335
    %v347 = vpack.c.b16 %v338, %v337
    %v348 = vpack.c.b16 %v340, %v339
    %357 = vmatprep.subr.bf16.mxu0 0
    %358 = vmatpush1.bf16.msra.mxu0 %v348
    %359 = vmatprep.subr.bf16.mxu0 0
    %360 = vmatpush1.bf16.msra.mxu0 %v347
    %361 = vmatprep.subr.bf16.mxu0 0
    %362 = vmatpush1.bf16.msra.mxu0 %v346
    %363 = vmatprep.subr.bf16.mxu0 0
    %364 = vmatpush1.bf16.msra.mxu0 %v345
    %365 = vmatprep.subr.bf16.mxu0 0
    %366 = vmatpush1.bf16.msra.mxu0 %v344
    %367 = vmatprep.subr.bf16.mxu0 0
    %368 = vmatpush1.bf16.msra.mxu0 %v343
    %369 = vmatprep.subr.bf16.mxu0 0
    %370 = vmatpush1.bf16.msra.mxu0 %v342
    %371 = vmatprep.subr.bf16.mxu0 0
    %372 = vmatpush1.bf16.msra.mxu0 %v341
    %373 = vmatprep.subr.bf16.mxu0 0
    %374 = vmatpush2.bf16.msra.mxu0 0
    %375 = vmatprep.subr.bf16.mxu0 0
    %376 = vmatpush2.bf16.msra.mxu0 0
    %377 = vmatprep.subr.bf16.mxu0 0
    %378 = vmatpush2.bf16.msra.mxu0 0
    %379 = vmatprep.subr.bf16.mxu0 0
    %380 = vmatpush2.bf16.msra.mxu0 0
    %381 = vmatprep.subr.bf16.mxu0 0
    %382 = vmatpush2.bf16.msra.mxu0 0
    %383 = vmatprep.subr.bf16.mxu0 0
    %384 = vmatpush2.bf16.msra.mxu0 0
    %385 = vmatprep.subr.bf16.mxu0 0
    %386 = vmatpush2.bf16.msra.mxu0 0
    %387 = vmatprep.subr.bf16.mxu0 0
    %388 = vmatpush2.bf16.msra.mxu0 0
    %389 = vmatprep.mubr.bf16.mxu0 0
    %390 = vmatmul.mubr.bf16.gmra.mxu0 %v285
    %v391 = vpop.f32.mrf.mxu0
    %v392 = vadd.f32 %v307, %v391
    %v393 = vpop.f32.mrf.mxu0
    %v394 = vpop.f32.mrf.mxu0
    %v395 = vadd.f32 %v307, %v394
    %v396 = vpop.f32.mrf.mxu0
    %397 = vdwg.mxu0
    %v398 = vmax.f32 %v392, 0.0
    %v399 = vmax.f32 %v395, 0.0
    %v400 = vpack.c.bf16 %v399, %v398
    %v401 = vld [vmem:[%s8] sm:$0xf]
    %v402 = vld [vmem:[%s8 + $0x4] sm:$0xf]
    %v403 = vld [vmem:[%s8 + $0x8] sm:$0xf]
    %v404 = vld [vmem:[%s8 + $0xc] sm:$0xf]
    %v405 = vld [vmem:[%s8 + $0x10] sm:$0xf]
    %v406 = vld [vmem:[%s8 + $0x14] sm:$0xf]
    %v407 = vld [vmem:[%s8 + $0x18] sm:$0xf]
    %v408 = vld [vmem:[%s8 + $0x1c] sm:$0xf]
    %v409 = vld [vmem:[%s8 + $0x20] sm:$0xf]
    %v410 = vld [vmem:[%s8 + $0x24] sm:$0xf]
    %v411 = vld [vmem:[%s8 + $0x28] sm:$0xf]
    %v412 = vld [vmem:[%s8 + $0x2c] sm:$0xf]
    %v413 = vld [vmem:[%s8 + $0x30] sm:$0xf]
    %v414 = vld [vmem:[%s8 + $0x34] sm:$0xf]
    %v415 = vld [vmem:[%s8 + $0x38] sm:$0xf]
    %v416 = vld [vmem:[%s8 + $0x3c] sm:$0xf]
    %v417 = vld [vmem:[%s9] sm:$0x1]
    %v419 = vlaneseq
    %v420 = vshrl.u32 %v419, 7
    %v421 = vsub.s32 0, %v420
    %v422 = vrot.slane %v417, %v421
    %v440 = vunpack.c.l.b16 %v401
    %v441 = vunpack.c.l.b16 %v402
    %v442 = vunpack.c.l.b16 %v403
    %v443 = vunpack.c.l.b16 %v404
    %v444 = vunpack.c.l.b16 %v405
    %v445 = vunpack.c.l.b16 %v406
    %v446 = vunpack.c.l.b16 %v407
    %v447 = vunpack.c.l.b16 %v408
    %v448 = vunpack.c.l.b16 %v409
    %v449 = vunpack.c.l.b16 %v410
    %v450 = vunpack.c.l.b16 %v411
    %v451 = vunpack.c.l.b16 %v412
    %v452 = vunpack.c.l.b16 %v413
    %v453 = vunpack.c.l.b16 %v414
    %v454 = vunpack.c.l.b16 %v415
    %v455 = vunpack.c.l.b16 %v416
    %v456 = vpack.c.b16 %v441, %v440
    %v457 = vpack.c.b16 %v443, %v442
    %v458 = vpack.c.b16 %v445, %v444
    %v459 = vpack.c.b16 %v447, %v446
    %v460 = vpack.c.b16 %v449, %v448
    %v461 = vpack.c.b16 %v451, %v450
    %v462 = vpack.c.b16 %v453, %v452
    %v463 = vpack.c.b16 %v455, %v454
    %472 = vmatprep.subr.bf16.mxu0 0
    %473 = vmatpush1.bf16.msra.mxu0 %v463
    %474 = vmatprep.subr.bf16.mxu0 0
    %475 = vmatpush1.bf16.msra.mxu0 %v462
    %476 = vmatprep.subr.bf16.mxu0 0
    %477 = vmatpush1.bf16.msra.mxu0 %v461
    %478 = vmatprep.subr.bf16.mxu0 0
    %479 = vmatpush1.bf16.msra.mxu0 %v460
    %480 = vmatprep.subr.bf16.mxu0 0
    %481 = vmatpush1.bf16.msra.mxu0 %v459
    %482 = vmatprep.subr.bf16.mxu0 0
    %483 = vmatpush1.bf16.msra.mxu0 %v458
    %484 = vmatprep.subr.bf16.mxu0 0
    %485 = vmatpush1.bf16.msra.mxu0 %v457
    %486 = vmatprep.subr.bf16.mxu0 0
    %487 = vmatpush1.bf16.msra.mxu0 %v456
    %488 = vmatprep.subr.bf16.mxu0 0
    %489 = vmatpush2.bf16.msra.mxu0 0
    %490 = vmatprep.subr.bf16.mxu0 0
    %491 = vmatpush2.bf16.msra.mxu0 0
    %492 = vmatprep.subr.bf16.mxu0 0
    %493 = vmatpush2.bf16.msra.mxu0 0
    %494 = vmatprep.subr.bf16.mxu0 0
    %495 = vmatpush2.bf16.msra.mxu0 0
    %496 = vmatprep.subr.bf16.mxu0 0
    %497 = vmatpush2.bf16.msra.mxu0 0
    %498 = vmatprep.subr.bf16.mxu0 0
    %499 = vmatpush2.bf16.msra.mxu0 0
    %500 = vmatprep.subr.bf16.mxu0 0
    %501 = vmatpush2.bf16.msra.mxu0 0
    %502 = vmatprep.subr.bf16.mxu0 0
    %503 = vmatpush2.bf16.msra.mxu0 0
    %504 = vmatprep.mubr.bf16.mxu0 0
    %505 = vmatmul.mubr.bf16.gmra.mxu0 %v400
    %v506 = vpop.f32.mrf.mxu0
    %v507 = vadd.f32 %v422, %v506
    %v508 = vpop.f32.mrf.mxu0
    %v509 = vpop.f32.mrf.mxu0
    %v510 = vadd.f32 %v422, %v509
    %v511 = vpop.f32.mrf.mxu0
    %512 = vdwg.mxu0
    %v513 = vmul.f32 %v507, 0.1
    %v514 = vmul.f32 %v510, 0.1
    %vm515 = vcmask 31744
    %v516 = vsel %vm515, %v513, -inf
    %517 = vmax.xlane.f32.xlu0 %v516
    %v518 = vpop.xlane.xlu0 %517
    %v519 = vsel %vm515, %v514, -inf
    %520 = vmax.xlane.f32.xlu0 %v519
    %v521 = vpop.xlane.xlu0 %520
    %v522 = vsub.f32 %v513, %v518
    %v523 = vsub.f32 %v514, %v521
    %v524 = vmul.f32 %v522, 1.442695
    %v525 = vpow.pop %v524
    %v526 = vmul.f32 %v523, 1.442695
    %v527 = vpow.pop %v526
    %v528 = vsel %vm515, %v525, 0.0
    %529 = vadd.xlane.f32.xlu0 %v528
    %v530 = vpop.xlane.xlu0 %529
    %v531 = vsel %vm515, %v527, 0.0
    %532 = vadd.xlane.f32.xlu0 %v531
    %v533 = vpop.xlane.xlu0 %532
    %v534 = vrcp.pop %v530
    %v535 = vrcp.pop %v533
    %v536 = vld [vmem:[#allocation2] sm:$0x1]
    %v538 = vlaneseq
    %v539 = vshrl.u32 %v538, 7
    %v540 = vsub.s32 0, %v539
    %v541 = vrot.slane %v536, %v540
    %v543 = vmul.f32 %v534, %v541
    %v544 = vmul.f32 %v535, %v541
    %546 = vset.pattern.permute.xlu0 0
    %547 = vperm.xlu0 %546, %v543
    %v548 = vpop.permute.xlu0 %547
    %551 = vset.pattern.permute.xlu0 0
    %552 = vperm.xlu0 %551, %v544
    %v553 = vpop.permute.xlu0 %552
    %v555 = vmul.f32 %v525, %v548
    %v556 = vmul.f32 %v527, %v553
    %557 = vst.msk [vmem:[%s10] sm:$0xff] %vm515, %v555
    %558 = vst.msk [vmem:[%s10 + $0x8] sm:$0xff] %vm515, %v556
    // Predicated region
    $region54: #{tpu_custom_call.1} parent=1 // pred_check
      _
    $region55: #{tpu_custom_call.1} parent=1 // pred_check_branch
      %560 = sbr.rel (0) target = $region57
    $region56: #{tpu_custom_call.1} parent=1 // pred_region
      _
    $region57: #{tpu_custom_call.1} parent=1 // pred_fallthru
      _
    // Predicated region
    $region58: #{tpu_custom_call.1} parent=1 // pred_check
      _
    $region59: #{tpu_custom_call.1} parent=1 // pred_check_branch
      %562 = sbr.rel (0) target = $region61
    $region60: #{tpu_custom_call.1} parent=1 // pred_region
      _
    $region61: #{tpu_custom_call.1} parent=1 // pred_fallthru
      _
    %563 = vsyncpa [#allocation4], 1
    %564 = vsyncpa [#allocation6], 1

</llo_original>
